<compile_context>
chip_gen: v7x
topology: tpu7x:2x2x1
jax: 0.10.0
libtpu: 0.0.40
codegen_flags: <defaults>
</compile_context>

<pallas_src>
import jax
import jax.numpy as jnp
from jax.experimental import pallas as pl
from jax.experimental.pallas import tpu as pltpu


def _actor_kernel(xt_ref, w1t_ref, b1_ref, w2t_ref, b2_ref, w3_ref, b3_ref, out_ref):
    # xt_ref: (D, N) -- one candidate set, candidates on the lane axis.
    xt = xt_ref[...]

    # fc1 + ReLU:   (FC1, D) @ (D, N) -> (FC1, N)
    h1 = jnp.dot(w1t_ref[...], xt, preferred_element_type=jnp.float32) + b1_ref[...]
    h1 = jnp.maximum(h1, 0.0)

    # fc2 + ReLU:   (FC2, FC1) @ (FC1, N) -> (FC2, N)
    h2 = jnp.dot(w2t_ref[...], h1, preferred_element_type=jnp.float32) + b2_ref[...]
    h2 = jnp.maximum(h2, 0.0)

    # fc3 (FC2 -> 1) as a VPU multiply + sublane reduce instead of a one-column
    # MXU matmul.  Result is a lane-dense (1, N) logit row.  b3 comes from SMEM.
    logits = jnp.sum(h2 * w3_ref[...], axis=0, keepdims=True) + b3_ref[0, 0]

    # Softmax over the candidate axis (now the lane axis): lane reduces + EUP.
    m = jnp.max(logits, axis=-1, keepdims=True)
    e = jnp.exp(logits - m)
    s = jnp.sum(e, axis=-1, keepdims=True)
    out_ref[...] = e * pl.reciprocal(s, approx=True)


def grasp_actor_forward(state, params):
    """state: (B, N, D) or (N, D) float32 batch of grasp-candidate features.
    Returns Categorical probabilities with PyTorch layout: (B, N, 1) / (N, 1)."""
    w1t, b1, w2t, b2, w3, b3 = params
    squeeze_batch = state.ndim == 2
    if squeeze_batch:
        state = state[None]
    B, N, D = state.shape
    FC1 = w1t.shape[0]
    FC2 = w2t.shape[0]

    # Lane-major view of the candidate axis (layout plumbing, not compute).
    xt = jnp.swapaxes(state, -1, -2)  # (B, D, N)

    probs_t = pl.pallas_call(
        _actor_kernel,
        out_shape=jax.ShapeDtypeStruct((B, 1, N), jnp.float32),
        grid=(B,),
        in_specs=[
            pl.BlockSpec((None, D, N), lambda b: (b, 0, 0)),      # x^T per candidate set
            pl.BlockSpec((FC1, D), lambda b: (0, 0)),             # W1^T (VMEM resident)
            pl.BlockSpec((FC1, 1), lambda b: (0, 0)),             # b1 column
            pl.BlockSpec((FC2, FC1), lambda b: (0, 0)),           # W2^T
            pl.BlockSpec((FC2, 1), lambda b: (0, 0)),             # b2 column
            pl.BlockSpec((FC2, 1), lambda b: (0, 0)),             # w3 column (VPU reduce)
            pl.BlockSpec(memory_space=pltpu.MemorySpace.SMEM),    # b3 scalar in SMEM
        ],
        out_specs=pl.BlockSpec((None, 1, N), lambda b: (b, 0, 0)),
        compiler_params=pltpu.CompilerParams(
            dimension_semantics=("parallel",),
        ),
    )(xt, w1t, b1, w2t, b2, w3, b3)

    probs = jnp.swapaxes(probs_t, -1, -2)  # (B, N, 1): matches Softmax(dim=-2) output
    if squeeze_batch:
        probs = probs[0]
    return probs


def init_params(key, input_dim, fc1_dims, fc2_dims):
    """PyTorch nn.Linear default init (U[-1/sqrt(fan_in), +1/sqrt(fan_in)]),
    stored pre-transposed for the lane-major kernel (done once, not per call)."""
    ks = jax.random.split(key, 6)

    def lin_t(kw, kb, fan_in, fan_out):
        bound = 1.0 / jnp.sqrt(fan_in)
        w_t = jax.random.uniform(kw, (fan_out, fan_in), jnp.float32, -bound, bound)
        b = jax.random.uniform(kb, (fan_out, 1), jnp.float32, -bound, bound)
        return w_t, b

    w1t, b1 = lin_t(ks[0], ks[1], input_dim, fc1_dims)
    w2t, b2 = lin_t(ks[2], ks[3], fc1_dims, fc2_dims)
    w3t, b3 = lin_t(ks[4], ks[5], fc2_dims, 1)
    w3 = w3t.reshape(fc2_dims, 1)   # (FC2, 1) column for the in-kernel VPU reduce
    b3 = b3.reshape(1, 1)           # (1, 1) SMEM scalar
    return (w1t, b1, w2t, b2, w3, b3)


def _reference(state, params):
    w1t, b1, w2t, b2, w3, b3 = params
    h1 = jnp.maximum(state @ w1t.T + b1[:, 0], 0.0)
    h2 = jnp.maximum(h1 @ w2t.T + b2[:, 0], 0.0)
    logits = h2 @ w3 + b3[0, 0]
    return jax.nn.softmax(logits, axis=-2)


if __name__ == "__main__":
    key = jax.random.PRNGKey(0)
    k_param, k_state = jax.random.split(key)

    B, N, D = 4, 8, 16       # 4 candidate sets x 8 grasp candidates x 16-d features
    FC1, FC2 = 128, 128      # 128-wide hidden layers (pad-free on the lane axis)

    params = init_params(k_param, D, FC1, FC2)
    state = jax.random.normal(k_state, (B, N, D), jnp.float32)

    probs = jax.block_until_ready(grasp_actor_forward(state, params))
    ref = _reference(state, params)

    assert probs.shape == (B, N, 1)
    # approx reciprocal (EUP) => slightly looser tolerance than exact divide
    assert jnp.allclose(probs, ref, atol=2e-3, rtol=2e-2)
    assert jnp.allclose(jnp.sum(probs, axis=-2), 1.0, atol=2e-2)

    print("KERNEL_OK")
</pallas_src>

<mosaic_0001>
module attributes {stable_mosaic.version = 11 : i64} {
  func.func @_actor_kernel(%arg0: i32, %arg1: memref<1x16x8xf32, #tpu.memory_space<vmem>>, %arg2: memref<128x16xf32, #tpu.memory_space<vmem>>, %arg3: memref<128x1xf32, #tpu.memory_space<vmem>>, %arg4: memref<128x128xf32, #tpu.memory_space<vmem>>, %arg5: memref<128x1xf32, #tpu.memory_space<vmem>>, %arg6: memref<128x1xf32, #tpu.memory_space<vmem>>, %arg7: memref<1x1xf32, #tpu.memory_space<smem>>, %arg8: memref<1x1x8xf32, #tpu.memory_space<vmem>>) attributes {dimension_semantics = [#tpu.dimension_semantics<parallel>], iteration_bounds = array<i64: 4>, scalar_prefetch = 0 : i64, scratch_operands = 0 : i64, tpu.core_type = #tpu.core_type<tc>, window_params = [{transform_indices = @transform_0, window_bounds = array<i64: 1, 16, 8>}, {pipeline_mode = #tpu.pipeline_mode<synchronous>, transform_indices = @transform_1, window_bounds = array<i64: 128, 16>}, {pipeline_mode = #tpu.pipeline_mode<synchronous>, transform_indices = @transform_2, window_bounds = array<i64: 128, 1>}, {pipeline_mode = #tpu.pipeline_mode<synchronous>, transform_indices = @transform_3, window_bounds = array<i64: 128, 128>}, {pipeline_mode = #tpu.pipeline_mode<synchronous>, transform_indices = @transform_4, window_bounds = array<i64: 128, 1>}, {pipeline_mode = #tpu.pipeline_mode<synchronous>, transform_indices = @transform_5, window_bounds = array<i64: 128, 1>}, {transform_indices = @transform_6, window_bounds = array<i64: 1, 1>}, {transform_indices = @transform_7, window_bounds = array<i64: 1, 1, 8>}]} {
    %c0 = arith.constant 0 : index
    %c0_0 = arith.constant 0 : index
    %c0_1 = arith.constant 0 : index
    %0 = vector.load %arg1[%c0, %c0_0, %c0_1] : memref<1x16x8xf32, #tpu.memory_space<vmem>>, vector<1x16x8xf32>
    %1 = vector.shape_cast %0 : vector<1x16x8xf32> to vector<16x8xf32>
    %c0_2 = arith.constant 0 : index
    %c0_3 = arith.constant 0 : index
    %2 = vector.load %arg2[%c0_2, %c0_3] : memref<128x16xf32, #tpu.memory_space<vmem>>, vector<128x16xf32>
    %cst = arith.constant dense<0.000000e+00> : vector<128x8xf32>
    %3 = tpu.matmul %2, %1, %cst {dimension_numbers = #tpu.dot_dimension_numbers<[1], [0], [0], [1], [0, 0, 1, 1], [], []>} : vector<128x16xf32>, vector<16x8xf32>, vector<128x8xf32> -> vector<128x8xf32>
    %c0_4 = arith.constant 0 : index
    %c0_5 = arith.constant 0 : index
    %4 = vector.load %arg3[%c0_4, %c0_5] : memref<128x1xf32, #tpu.memory_space<vmem>>, vector<128x1xf32>
    %5 = vector.broadcast %4 : vector<128x1xf32> to vector<128x8xf32>
    %6 = arith.addf %3, %5 : vector<128x8xf32>
    %cst_6 = arith.constant 0.000000e+00 : f32
    %7 = vector.broadcast %cst_6 : f32 to vector<128x8xf32>
    %8 = arith.maximumf %6, %7 : vector<128x8xf32>
    %c0_7 = arith.constant 0 : index
    %c0_8 = arith.constant 0 : index
    %9 = vector.load %arg4[%c0_7, %c0_8] : memref<128x128xf32, #tpu.memory_space<vmem>>, vector<128x128xf32>
    %cst_9 = arith.constant dense<0.000000e+00> : vector<128x8xf32>
    %10 = tpu.matmul %9, %8, %cst_9 {dimension_numbers = #tpu.dot_dimension_numbers<[1], [0], [0], [1], [0, 0, 1, 1], [], []>} : vector<128x128xf32>, vector<128x8xf32>, vector<128x8xf32> -> vector<128x8xf32>
    %c0_10 = arith.constant 0 : index
    %c0_11 = arith.constant 0 : index
    %11 = vector.load %arg5[%c0_10, %c0_11] : memref<128x1xf32, #tpu.memory_space<vmem>>, vector<128x1xf32>
    %12 = vector.broadcast %11 : vector<128x1xf32> to vector<128x8xf32>
    %13 = arith.addf %10, %12 : vector<128x8xf32>
    %cst_12 = arith.constant 0.000000e+00 : f32
    %14 = vector.broadcast %cst_12 : f32 to vector<128x8xf32>
    %15 = arith.maximumf %13, %14 : vector<128x8xf32>
    %c0_13 = arith.constant 0 : index
    %c0_14 = arith.constant 0 : index
    %16 = vector.load %arg6[%c0_13, %c0_14] : memref<128x1xf32, #tpu.memory_space<vmem>>, vector<128x1xf32>
    %17 = vector.broadcast %16 : vector<128x1xf32> to vector<128x8xf32>
    %18 = arith.mulf %15, %17 : vector<128x8xf32>
    %cst_15 = arith.constant dense<0.000000e+00> : vector<8xf32>
    %19 = vector.multi_reduction <add>, %18, %cst_15 [0] : vector<128x8xf32> to vector<8xf32>
    %20 = vector.shape_cast %19 : vector<8xf32> to vector<1x8xf32>
    %c0_16 = arith.constant 0 : index
    %c0_17 = arith.constant 0 : index
    %21 = memref.load %arg7[%c0_16, %c0_17] : memref<1x1xf32, #tpu.memory_space<smem>>
    %22 = vector.broadcast %21 : f32 to vector<1x8xf32>
    %23 = arith.addf %20, %22 : vector<1x8xf32>
    %cst_18 = arith.constant dense<0xFF800000> : vector<1xf32>
    %24 = vector.multi_reduction <maximumf>, %23, %cst_18 [1] : vector<1x8xf32> to vector<1xf32>
    %25 = vector.shape_cast %24 : vector<1xf32> to vector<1x1xf32>
    %26 = vector.broadcast %25 : vector<1x1xf32> to vector<1x8xf32>
    %27 = arith.subf %23, %26 : vector<1x8xf32>
    %28 = math.exp %27 : vector<1x8xf32>
    %cst_19 = arith.constant dense<0.000000e+00> : vector<1xf32>
    %29 = vector.multi_reduction <add>, %28, %cst_19 [1] : vector<1x8xf32> to vector<1xf32>
    %30 = vector.shape_cast %29 : vector<1xf32> to vector<1x1xf32>
    %31 = tpu.reciprocal %30 {approx = true} : vector<1x1xf32> -> vector<1x1xf32>
    %32 = vector.broadcast %31 : vector<1x1xf32> to vector<1x8xf32>
    %33 = arith.mulf %28, %32 : vector<1x8xf32>
    %c0_20 = arith.constant 0 : index
    %c0_21 = arith.constant 0 : index
    %c0_22 = arith.constant 0 : index
    %34 = vector.load %arg8[%c0_20, %c0_21, %c0_22] : memref<1x1x8xf32, #tpu.memory_space<vmem>>, vector<1x1x8xf32>
    %35 = vector.shape_cast %34 : vector<1x1x8xf32> to vector<1x8xf32>
    %36 = vector.shape_cast %33 : vector<1x8xf32> to vector<1x1x8xf32>
    tpu.vector_store %arg8[%c0_20, %c0_21, %c0_22], %36 {strides = array<i32>} : memref<1x1x8xf32, #tpu.memory_space<vmem>>, vector<1x1x8xf32>,
    return
  }
  func.func @transform_0(%arg0: i32) -> (i32, i32, i32) {
    %c0_i32 = arith.constant 0 : i32
    %c0_i32_0 = arith.constant 0 : i32
    %c0_i32_1 = arith.constant 0 : i32
    return %arg0, %c0_i32, %c0_i32_0 : i32, i32, i32
  }
  func.func @transform_1(%arg0: i32) -> (i32, i32) {
    %c0_i32 = arith.constant 0 : i32
    %c0_i32_0 = arith.constant 0 : i32
    %c0_i32_1 = arith.constant 0 : i32
    return %c0_i32, %c0_i32_0 : i32, i32
  }
  func.func @transform_2(%arg0: i32) -> (i32, i32) {
    %c0_i32 = arith.constant 0 : i32
    %c0_i32_0 = arith.constant 0 : i32
    %c0_i32_1 = arith.constant 0 : i32
    return %c0_i32, %c0_i32_0 : i32, i32
  }
  func.func @transform_3(%arg0: i32) -> (i32, i32) {
    %c0_i32 = arith.constant 0 : i32
    %c0_i32_0 = arith.constant 0 : i32
    %c0_i32_1 = arith.constant 0 : i32
    return %c0_i32, %c0_i32_0 : i32, i32
  }
  func.func @transform_4(%arg0: i32) -> (i32, i32) {
    %c0_i32 = arith.constant 0 : i32
    %c0_i32_0 = arith.constant 0 : i32
    %c0_i32_1 = arith.constant 0 : i32
    return %c0_i32, %c0_i32_0 : i32, i32
  }
  func.func @transform_5(%arg0: i32) -> (i32, i32) {
    %c0_i32 = arith.constant 0 : i32
    %c0_i32_0 = arith.constant 0 : i32
    %c0_i32_1 = arith.constant 0 : i32
    return %c0_i32, %c0_i32_0 : i32, i32
  }
  func.func @transform_6(%arg0: i32) -> (i32, i32) {
    %c0_i32 = arith.constant 0 : i32
    %c0_i32_0 = arith.constant 0 : i32
    %c0_i32_1 = arith.constant 0 : i32
    return %c0_i32, %c0_i32_0 : i32, i32
  }
  func.func @transform_7(%arg0: i32) -> (i32, i32, i32) {
    %c0_i32 = arith.constant 0 : i32
    %c0_i32_0 = arith.constant 0 : i32
    %c0_i32_1 = arith.constant 0 : i32
    return %arg0, %c0_i32, %c0_i32_0 : i32, i32, i32
  }
}

</mosaic_0001>

<llo_original>
// kernel: tpu_custom_call.1
$region0: #{tpu_custom_call.1}
  #allocation0 [shape = 'u32[]', space=smem, size = 0x4, offset = 0x4, fixed_abs, tag = 'smem constant byte address 0x4 - core index']
  #allocation1 [shape = 'u32[144,128]{1,0:T(1,128)}', space=vmem, size = 0x12000, scoped, tag = 'internal scratch']
  #allocation2 [shape = 'f32[1,1]{1,0:T(1,128)S(6)}', space=smem, size = 0x200, scoped, tag = 'scoped memory for tpu_custom_call.1']
  %s0 = inlined_call_operand.vmem [shape: f32[4,16,8], index: 0, kind: input, shape index: {}]
  %s1 = inlined_call_operand.vmem [shape: f32[128,16], index: 1, kind: input, shape index: {}]
  %s2 = inlined_call_operand.vmem [shape: f32[128,1], index: 2, kind: input, shape index: {}]
  %s3 = inlined_call_operand.vmem [shape: f32[128,128], index: 3, kind: input, shape index: {}]
  %s4 = inlined_call_operand.vmem [shape: f32[128,1], index: 4, kind: input, shape index: {}]
  %s5 = inlined_call_operand.vmem [shape: f32[128,1], index: 5, kind: input, shape index: {}]
  %s6 = inlined_call_operand.<no memory space> [shape: f32[1,1], index: 6, kind: input, shape index: {}]
  %s7 = inlined_call_operand.hbm [shape: f32[4,1,8], index: 7, kind: output, shape index: {}]
  %s8 = sld [smem:[#allocation0]]
  $region61: #{tpu_custom_call.1} parent=0
    _
  %s10 = ssub.s32 1, %s8
  %s11 = scalar_select 0, %s10, %s8
  %12 = sst [smem:[#allocation2]] %s6
  $region1: #{tpu_custom_call.1} parent=0
    #allocation3 [shape = 'u8[1024]{0}', space=vmem, size = 0x400, scoped, tag = 'output window, operand 0']
    #allocation4 [shape = 's32[2]{0}', space=sflag, size = 0x8, scoped, tag = 'scoped memory for tpu_custom_call.1']
    %13 = vsyncpa [#allocation4], 0
    %s14 = scalar_lea.sflag [#allocation4], 1
    %15 = vsyncpa %s14, 0
    loop: start=0, step=1, limit=6
    $region2: #{tpu_custom_call.1} parent=1 // loop_pre_header
      _
    $region3: #{tpu_custom_call.1} parent=1 // loop_header
      %s17 = sphi 0, %s21
      %p18 = scmp.ge.s32.totalorder %s17, 6
      %s27 = sphi 0, %s29
      %s30 = sphi 0, %s27
      %s31 = sphi 0, %s30
      %s47 = sphi 0, %s31
      %s51 = sphi 0, %s51
      %s53 = sphi 0, %s51
      %s54 = sphi 0, %s53
      %s68 = sphi 0, %s54
      %s72 = sphi 0, %s72
      %s74 = sphi 0, %s72
      %s75 = sphi 0, %s74
      %s89 = sphi 0, %s75
      %s93 = sphi 0, %s93
      %s95 = sphi 0, %s93
      %s96 = sphi 0, %s95
      %s110 = sphi 0, %s96
      %s114 = sphi 0, %s114
      %s116 = sphi 0, %s114
      %s117 = sphi 0, %s116
      %s131 = sphi 0, %s117
      %s135 = sphi 0, %s135
      %s137 = sphi 0, %s135
      %s138 = sphi 0, %s137
      %s152 = sphi 0, %s138
      %s156 = sphi 0, %s156
      %s158 = sphi 0, %s156
      %s159 = sphi 0, %s158
      %s173 = sphi 0, %s159
      %s179 = sphi 0, %s181
      %s182 = sphi 0, %s179
      %s183 = sphi 0, %s182
      %s199 = sphi 0, %s183
    $region4: #{tpu_custom_call.1} parent=1 // loop_header_branch
      %20 = sbr.rel (%p18) target = $region8
    $region5: #{tpu_custom_call.1} parent=1 // loop_body
      %s22 = ssub.s32 %s17, 1
      %s23 = ssub.s32 %s17, 2
      %s24 = sadd.s32 %s17, 1
      %s25 = ssub.s32 %s17, %s24
      %p26 = scmp.eq.s32.totalorder %s25, 0
      %s28 = sadd.s32 %s27, 1
      %s29 = scalar_select %p26, %s27, %s28
      %p32 = pneg %p26
      %p33 = scmp.eq.s32.totalorder %s17, 3
      %p34 = por %p32, %p33
      %p35 = scmp.ne.s32.totalorder %s27, %s30
      %p36 = scmp.eq.s32.totalorder %s17, 0
      %p37 = por %p35, %p36
      %p38 = scmp.ne.s32.totalorder %s27, %s30
      %p39 = scmp.eq.s32.totalorder %s22, 3
      %p40 = por %p38, %p39
      %p41 = scmp.ne.s32.totalorder %s30, %s31
      %p42 = scmp.eq.s32.totalorder %s22, 0
      %p43 = por %p41, %p42
      %p44 = scmp.ne.s32.totalorder %s30, %s31
      %p45 = scmp.eq.s32.totalorder %s23, 3
      %p46 = por %p44, %p45
      %p48 = scmp.ne.s32.totalorder %s31, %s47
      %p49 = scmp.eq.s32.totalorder %s23, 0
      %p50 = por %p48, %p49
      %s52 = sadd.s32 %s51, 1
      %p55 = scmp.eq.s32.totalorder %s17, 3
      %p56 = scmp.ne.s32.totalorder %s51, %s53
      %p57 = scmp.eq.s32.totalorder %s17, 0
      %p58 = por %p56, %p57
      %p59 = scmp.ne.s32.totalorder %s51, %s53
      %p60 = scmp.eq.s32.totalorder %s22, 3
      %p61 = por %p59, %p60
      %p62 = scmp.ne.s32.totalorder %s53, %s54
      %p63 = scmp.eq.s32.totalorder %s22, 0
      %p64 = por %p62, %p63
      %p65 = scmp.ne.s32.totalorder %s53, %s54
      %p66 = scmp.eq.s32.totalorder %s23, 3
      %p67 = por %p65, %p66
      %p69 = scmp.ne.s32.totalorder %s54, %s68
      %p70 = scmp.eq.s32.totalorder %s23, 0
      %p71 = por %p69, %p70
      %s73 = sadd.s32 %s72, 1
      %p76 = scmp.eq.s32.totalorder %s17, 3
      %p77 = scmp.ne.s32.totalorder %s72, %s74
      %p78 = scmp.eq.s32.totalorder %s17, 0
      %p79 = por %p77, %p78
      %p80 = scmp.ne.s32.totalorder %s72, %s74
      %p81 = scmp.eq.s32.totalorder %s22, 3
      %p82 = por %p80, %p81
      %p83 = scmp.ne.s32.totalorder %s74, %s75
      %p84 = scmp.eq.s32.totalorder %s22, 0
      %p85 = por %p83, %p84
      %p86 = scmp.ne.s32.totalorder %s74, %s75
      %p87 = scmp.eq.s32.totalorder %s23, 3
      %p88 = por %p86, %p87
      %p90 = scmp.ne.s32.totalorder %s75, %s89
      %p91 = scmp.eq.s32.totalorder %s23, 0
      %p92 = por %p90, %p91
      %s94 = sadd.s32 %s93, 1
      %p97 = scmp.eq.s32.totalorder %s17, 3
      %p98 = scmp.ne.s32.totalorder %s93, %s95
      %p99 = scmp.eq.s32.totalorder %s17, 0
      %p100 = por %p98, %p99
      %p101 = scmp.ne.s32.totalorder %s93, %s95
      %p102 = scmp.eq.s32.totalorder %s22, 3
      %p103 = por %p101, %p102
      %p104 = scmp.ne.s32.totalorder %s95, %s96
      %p105 = scmp.eq.s32.totalorder %s22, 0
      %p106 = por %p104, %p105
      %p107 = scmp.ne.s32.totalorder %s95, %s96
      %p108 = scmp.eq.s32.totalorder %s23, 3
      %p109 = por %p107, %p108
      %p111 = scmp.ne.s32.totalorder %s96, %s110
      %p112 = scmp.eq.s32.totalorder %s23, 0
      %p113 = por %p111, %p112
      %s115 = sadd.s32 %s114, 1
      %p118 = scmp.eq.s32.totalorder %s17, 3
      %p119 = scmp.ne.s32.totalorder %s114, %s116
      %p120 = scmp.eq.s32.totalorder %s17, 0
      %p121 = por %p119, %p120
      %p122 = scmp.ne.s32.totalorder %s114, %s116
      %p123 = scmp.eq.s32.totalorder %s22, 3
      %p124 = por %p122, %p123
      %p125 = scmp.ne.s32.totalorder %s116, %s117
      %p126 = scmp.eq.s32.totalorder %s22, 0
      %p127 = por %p125, %p126
      %p128 = scmp.ne.s32.totalorder %s116, %s117
      %p129 = scmp.eq.s32.totalorder %s23, 3
      %p130 = por %p128, %p129
      %p132 = scmp.ne.s32.totalorder %s117, %s131
      %p133 = scmp.eq.s32.totalorder %s23, 0
      %p134 = por %p132, %p133
      %s136 = sadd.s32 %s135, 1
      %p139 = scmp.eq.s32.totalorder %s17, 3
      %p140 = scmp.ne.s32.totalorder %s135, %s137
      %p141 = scmp.eq.s32.totalorder %s17, 0
      %p142 = por %p140, %p141
      %p143 = scmp.ne.s32.totalorder %s135, %s137
      %p144 = scmp.eq.s32.totalorder %s22, 3
      %p145 = por %p143, %p144
      %p146 = scmp.ne.s32.totalorder %s137, %s138
      %p147 = scmp.eq.s32.totalorder %s22, 0
      %p148 = por %p146, %p147
      %p149 = scmp.ne.s32.totalorder %s137, %s138
      %p150 = scmp.eq.s32.totalorder %s23, 3
      %p151 = por %p149, %p150
      %p153 = scmp.ne.s32.totalorder %s138, %s152
      %p154 = scmp.eq.s32.totalorder %s23, 0
      %p155 = por %p153, %p154
      %s157 = sadd.s32 %s156, 1
      %p160 = scmp.eq.s32.totalorder %s17, 3
      %p161 = scmp.ne.s32.totalorder %s156, %s158
      %p162 = scmp.eq.s32.totalorder %s17, 0
      %p163 = por %p161, %p162
      %p164 = scmp.ne.s32.totalorder %s156, %s158
      %p165 = scmp.eq.s32.totalorder %s22, 3
      %p166 = por %p164, %p165
      %p167 = scmp.ne.s32.totalorder %s158, %s159
      %p168 = scmp.eq.s32.totalorder %s22, 0
      %p169 = por %p167, %p168
      %p170 = scmp.ne.s32.totalorder %s158, %s159
      %p171 = scmp.eq.s32.totalorder %s23, 3
      %p172 = por %p170, %p171
      %p174 = scmp.ne.s32.totalorder %s159, %s173
      %p175 = scmp.eq.s32.totalorder %s23, 0
      %p176 = por %p174, %p175
      %s177 = ssub.s32 %s17, %s24
      %p178 = scmp.eq.s32.totalorder %s177, 0
      %s180 = sadd.s32 %s179, 1
      %s181 = scalar_select %p178, %s179, %s180
      %p184 = pneg %p178
      %p185 = scmp.eq.s32.totalorder %s17, 3
      %p186 = por %p184, %p185
      %p187 = scmp.ne.s32.totalorder %s179, %s182
      %p188 = scmp.eq.s32.totalorder %s17, 0
      %p189 = por %p187, %p188
      %p190 = scmp.ne.s32.totalorder %s179, %s182
      %p191 = scmp.eq.s32.totalorder %s22, 3
      %p192 = por %p190, %p191
      %p193 = scmp.ne.s32.totalorder %s182, %s183
      %p194 = scmp.eq.s32.totalorder %s22, 0
      %p195 = por %p193, %p194
      %p196 = scmp.ne.s32.totalorder %s182, %s183
      %p197 = scmp.eq.s32.totalorder %s23, 3
      %p198 = por %p196, %p197
      %p200 = scmp.ne.s32.totalorder %s183, %s199
      %p201 = scmp.eq.s32.totalorder %s23, 0
      %p202 = por %p200, %p201
      %p203 = scmp.le.s32.totalorder 1, %s17
      %p204 = scmp.lt.s32.totalorder %s17, 5
      %p205 = pnand %p203, %p204
      %p206 = pneg %p205
      // Predicated region
      $region9: #{tpu_custom_call.1} parent=5 // pred_check
        _
      $region10: #{tpu_custom_call.1} parent=5 // pred_check_branch
        %208 = sbr.rel (%p205) target = $region12
      $region11: #{tpu_custom_call.1} parent=5 // pred_region
        %s209 = ssub.s32 %s17, 1
        // Predicated region
        $region13: #{tpu_custom_call.1} parent=11 // pred_check
          %p210 = pneg %p64
        $region14: #{tpu_custom_call.1} parent=11 // pred_check_branch
          %212 = sbr.rel (%p210) target = $region16
        $region15: #{tpu_custom_call.1} parent=11 // pred_region
          _
        $region16: #{tpu_custom_call.1} parent=11 // pred_fallthru
          _
        // Predicated region
        $region17: #{tpu_custom_call.1} parent=11 // pred_check
          %p213 = pneg %p85
        $region18: #{tpu_custom_call.1} parent=11 // pred_check_branch
          %215 = sbr.rel (%p213) target = $region20
        $region19: #{tpu_custom_call.1} parent=11 // pred_region
          _
        $region20: #{tpu_custom_call.1} parent=11 // pred_fallthru
          _
        // Predicated region
        $region21: #{tpu_custom_call.1} parent=11 // pred_check
          %p216 = pneg %p106
        $region22: #{tpu_custom_call.1} parent=11 // pred_check_branch
          %218 = sbr.rel (%p216) target = $region24
        $region23: #{tpu_custom_call.1} parent=11 // pred_region
          _
        $region24: #{tpu_custom_call.1} parent=11 // pred_fallthru
          _
        // Predicated region
        $region25: #{tpu_custom_call.1} parent=11 // pred_check
          %p219 = pneg %p127
        $region26: #{tpu_custom_call.1} parent=11 // pred_check_branch
          %221 = sbr.rel (%p219) target = $region28
        $region27: #{tpu_custom_call.1} parent=11 // pred_region
          _
        $region28: #{tpu_custom_call.1} parent=11 // pred_fallthru
          _
        // Predicated region
        $region29: #{tpu_custom_call.1} parent=11 // pred_check
          %p222 = pneg %p148
        $region30: #{tpu_custom_call.1} parent=11 // pred_check_branch
          %224 = sbr.rel (%p222) target = $region32
        $region31: #{tpu_custom_call.1} parent=11 // pred_region
          _
        $region32: #{tpu_custom_call.1} parent=11 // pred_fallthru
          _
        // Predicated region
        $region33: #{tpu_custom_call.1} parent=11 // pred_check
          %p225 = pneg %p169
        $region34: #{tpu_custom_call.1} parent=11 // pred_check_branch
          %227 = sbr.rel (%p225) target = $region36
        $region35: #{tpu_custom_call.1} parent=11 // pred_region
          _
        $region36: #{tpu_custom_call.1} parent=11 // pred_fallthru
          _
      $region12: #{tpu_custom_call.1} parent=5 // pred_fallthru
        _
      %p228 = scmp.lt.s32.totalorder %s17, 4
      // Predicated region
      $region37: #{tpu_custom_call.1} parent=5 // pred_check
        %p229 = pneg %p228
      $region38: #{tpu_custom_call.1} parent=5 // pred_check_branch
        %231 = sbr.rel (%p229) target = $region40
      $region39: #{tpu_custom_call.1} parent=5 // pred_region
        // Predicated region
        $region41: #{tpu_custom_call.1} parent=39 // pred_check
          %p232 = pneg %p37
        $region42: #{tpu_custom_call.1} parent=39 // pred_check_branch
          %234 = sbr.rel (%p232) target = $region44
        $region43: #{tpu_custom_call.1} parent=39 // pred_region
          %p235 = scmp.lt.s32.totalorder %s17, 3
          %s236 = scalar_select %p235, %s17, 3
          %s237 = smul.addr %s236, 2
          %s238 = smul.addr %s237, 8
          %s239 = scalar_lea.vmem %s0, %s238
        $region44: #{tpu_custom_call.1} parent=39 // pred_fallthru
          _
      $region40: #{tpu_custom_call.1} parent=5 // pred_fallthru
        _
      %p240 = scmp.le.s32.totalorder 1, %s17
      %p241 = scmp.lt.s32.totalorder %s17, 5
      %p242 = pnand %p240, %p241
      %p243 = pneg %p242
      // Predicated region
      $region45: #{tpu_custom_call.1} parent=5 // pred_check
        _
      $region46: #{tpu_custom_call.1} parent=5 // pred_check_branch
        %245 = sbr.rel (%p242) target = $region48
      $region47: #{tpu_custom_call.1} parent=5 // pred_region
        %s246 = ssub.s32 %s17, 1
        %p247 = scmp.lt.s32.totalorder %s22, 3
        %s248 = scalar_select %p247, %s22, 3
        %s249 = smul.addr %s248, 2
        %s250 = smul.addr %s249, 8
        %s251 = scalar_lea.vmem %s0, %s250
        %p252 = pneg %p43
        %p253 = pneg %p40
        %p254 = pneg %p64
        %p255 = pneg %p61
        %p256 = pneg %p85
        %p257 = pneg %p82
        %p258 = pneg %p106
        %p259 = pneg %p103
        %p260 = pneg %p127
        %p261 = pneg %p124
        %p262 = pneg %p148
        %p263 = pneg %p145
        %p264 = pneg %p169
        %p265 = pneg %p166
        %p266 = pneg %p195
        %p267 = pneg %p192
        %s268 = sand.u32 %s182, 1
        %s269 = scalar_lea.sflag [#allocation4], %s268
        %s270 = sand.u32 %s182, 1
        %s271 = scalar_lea.vmem [#allocation3], %s270
        %p272 = scmp.lt.s32.totalorder %s22, 3
        %s273 = scalar_select %p272, %s22, 3
        %s274 = smul.addr %s273, 2
        %s275 = smul.addr %s274, 8
        %s276 = scalar_lea.vmem %s0, %s275
        %v277 = vld [vmem:[%s276] sm:$0xff]
        %v278 = vld [vmem:[%s276 + $0x8] sm:$0xff]
        %v279 = vld [vmem:[%s1] sm:$0xff]
        %v280 = vld [vmem:[%s1 + $0x8] sm:$0xff]
        %v281 = vld [vmem:[%s1 + $0x10] sm:$0xff]
        %v282 = vld [vmem:[%s1 + $0x18] sm:$0xff]
        %v283 = vld [vmem:[%s1 + $0x20] sm:$0xff]
        %v284 = vld [vmem:[%s1 + $0x28] sm:$0xff]
        %v285 = vld [vmem:[%s1 + $0x30] sm:$0xff]
        %v286 = vld [vmem:[%s1 + $0x38] sm:$0xff]
        %v287 = vld [vmem:[%s1 + $0x40] sm:$0xff]
        %v288 = vld [vmem:[%s1 + $0x48] sm:$0xff]
        %v289 = vld [vmem:[%s1 + $0x50] sm:$0xff]
        %v290 = vld [vmem:[%s1 + $0x58] sm:$0xff]
        %v291 = vld [vmem:[%s1 + $0x60] sm:$0xff]
        %v292 = vld [vmem:[%s1 + $0x68] sm:$0xff]
        %v293 = vld [vmem:[%s1 + $0x70] sm:$0xff]
        %v294 = vld [vmem:[%s1 + $0x78] sm:$0xff]
        %v295 = vld [vmem:[%s2] sm:$0xff]
        %v296 = vld [vmem:[%s2 + $0x8] sm:$0xff]
        %v297 = vld [vmem:[%s2 + $0x10] sm:$0xff]
        %v298 = vld [vmem:[%s2 + $0x18] sm:$0xff]
        %v299 = vld [vmem:[%s2 + $0x20] sm:$0xff]
        %v300 = vld [vmem:[%s2 + $0x28] sm:$0xff]
        %v301 = vld [vmem:[%s2 + $0x30] sm:$0xff]
        %v302 = vld [vmem:[%s2 + $0x38] sm:$0xff]
        %v303 = vld [vmem:[%s2 + $0x40] sm:$0xff]
        %v304 = vld [vmem:[%s2 + $0x48] sm:$0xff]
        %v305 = vld [vmem:[%s2 + $0x50] sm:$0xff]
        %v306 = vld [vmem:[%s2 + $0x58] sm:$0xff]
        %v307 = vld [vmem:[%s2 + $0x60] sm:$0xff]
        %v308 = vld [vmem:[%s2 + $0x68] sm:$0xff]
        %v309 = vld [vmem:[%s2 + $0x70] sm:$0xff]
        %v310 = vld [vmem:[%s2 + $0x78] sm:$0xff]
        %312 = vset.pattern.permute.xlu0 0
        %313 = vperm.xlu0 %312, %v295
        %v314 = vpop.permute.xlu0 %313
        %317 = vset.pattern.permute.xlu0 0
        %318 = vperm.xlu0 %317, %v296
        %v319 = vpop.permute.xlu0 %318
        %322 = vset.pattern.permute.xlu0 0
        %323 = vperm.xlu0 %322, %v297
        %v324 = vpop.permute.xlu0 %323
        %327 = vset.pattern.permute.xlu0 0
        %328 = vperm.xlu0 %327, %v298
        %v329 = vpop.permute.xlu0 %328
        %332 = vset.pattern.permute.xlu0 0
        %333 = vperm.xlu0 %332, %v299
        %v334 = vpop.permute.xlu0 %333
        %337 = vset.pattern.permute.xlu0 0
        %338 = vperm.xlu0 %337, %v300
        %v339 = vpop.permute.xlu0 %338
        %342 = vset.pattern.permute.xlu0 0
        %343 = vperm.xlu0 %342, %v301
        %v344 = vpop.permute.xlu0 %343
        %347 = vset.pattern.permute.xlu0 0
        %348 = vperm.xlu0 %347, %v302
        %v349 = vpop.permute.xlu0 %348
        %352 = vset.pattern.permute.xlu0 0
        %353 = vperm.xlu0 %352, %v303
        %v354 = vpop.permute.xlu0 %353
        %357 = vset.pattern.permute.xlu0 0
        %358 = vperm.xlu0 %357, %v304
        %v359 = vpop.permute.xlu0 %358
        %362 = vset.pattern.permute.xlu0 0
        %363 = vperm.xlu0 %362, %v305
        %v364 = vpop.permute.xlu0 %363
        %367 = vset.pattern.permute.xlu0 0
        %368 = vperm.xlu0 %367, %v306
        %v369 = vpop.permute.xlu0 %368
        %372 = vset.pattern.permute.xlu0 0
        %373 = vperm.xlu0 %372, %v307
        %v374 = vpop.permute.xlu0 %373
        %377 = vset.pattern.permute.xlu0 0
        %378 = vperm.xlu0 %377, %v308
        %v379 = vpop.permute.xlu0 %378
        %382 = vset.pattern.permute.xlu0 0
        %383 = vperm.xlu0 %382, %v309
        %v384 = vpop.permute.xlu0 %383
        %387 = vset.pattern.permute.xlu0 0
        %388 = vperm.xlu0 %387, %v310
        %v389 = vpop.permute.xlu0 %388
        %vm391 = vcmask 130048
        %v393 = vsel %vm391, %v279, 0
        %v396 = vsel %vm391, %v280, 0
        %v399 = vsel %vm391, %v281, 0
        %v402 = vsel %vm391, %v282, 0
        %v405 = vsel %vm391, %v283, 0
        %v408 = vsel %vm391, %v284, 0
        %v411 = vsel %vm391, %v285, 0
        %v414 = vsel %vm391, %v286, 0
        %v417 = vsel %vm391, %v287, 0
        %v420 = vsel %vm391, %v288, 0
        %v423 = vsel %vm391, %v289, 0
        %v426 = vsel %vm391, %v290, 0
        %v429 = vsel %vm391, %v291, 0
        %v432 = vsel %vm391, %v292, 0
        %v435 = vsel %vm391, %v293, 0
        %v438 = vsel %vm391, %v294, 0
        %440 = vmatprep.subr.mxu0 0.0
        %441 = vmatpush1.msra.mxu0 %v277
        %442 = vmatprep.subr.mxu0 0.0
        %443 = vmatpush1.msra.mxu0 %v278
        %444 = vmatprep.subr.mxu0 0.0
        %445 = vmatpush1.msra.mxu0 0.0
        %446 = vmatprep.subr.mxu0 0.0
        %447 = vmatpush1.msra.mxu0 0.0
        %448 = vmatprep.subr.mxu0 0.0
        %449 = vmatpush1.msra.mxu0 0.0
        %450 = vmatprep.subr.mxu0 0.0
        %451 = vmatpush1.msra.mxu0 0.0
        %452 = vmatprep.subr.mxu0 0.0
        %453 = vmatpush1.msra.mxu0 0.0
        %454 = vmatprep.subr.mxu0 0.0
        %455 = vmatpush1.msra.mxu0 0.0
        %456 = vmatprep.subr.mxu0 0.0
        %457 = vmatpush1.msra.mxu0 0.0
        %458 = vmatprep.subr.mxu0 0.0
        %459 = vmatpush1.msra.mxu0 0.0
        %460 = vmatprep.subr.mxu0 0.0
        %461 = vmatpush1.msra.mxu0 0.0
        %462 = vmatprep.subr.mxu0 0.0
        %463 = vmatpush1.msra.mxu0 0.0
        %464 = vmatprep.subr.mxu0 0.0
        %465 = vmatpush1.msra.mxu0 0.0
        %466 = vmatprep.subr.mxu0 0.0
        %467 = vmatpush1.msra.mxu0 0.0
        %468 = vmatprep.subr.mxu0 0.0
        %469 = vmatpush1.msra.mxu0 0.0
        %470 = vmatprep.subr.mxu0 0.0
        %471 = vmatpush1.msra.mxu0 0.0
        %472 = vmatprep.subr.mxu0 0.0
        %473 = vmatpush1.msra.mxu0 0.0
        %474 = vmatprep.subr.mxu0 0.0
        %475 = vmatpush1.msra.mxu0 0.0
        %476 = vmatprep.subr.mxu0 0.0
        %477 = vmatpush1.msra.mxu0 0.0
        %478 = vmatprep.subr.mxu0 0.0
        %479 = vmatpush1.msra.mxu0 0.0
        %480 = vmatprep.subr.mxu0 0.0
        %481 = vmatpush1.msra.mxu0 0.0
        %482 = vmatprep.subr.mxu0 0.0
        %483 = vmatpush1.msra.mxu0 0.0
        %484 = vmatprep.subr.mxu0 0.0
        %485 = vmatpush1.msra.mxu0 0.0
        %486 = vmatprep.subr.mxu0 0.0
        %487 = vmatpush1.msra.mxu0 0.0
        %488 = vmatprep.subr.mxu0 0.0
        %489 = vmatpush1.msra.mxu0 0.0
        %490 = vmatprep.subr.mxu0 0.0
        %491 = vmatpush1.msra.mxu0 0.0
        %492 = vmatprep.subr.mxu0 0.0
        %493 = vmatpush1.msra.mxu0 0.0
        %494 = vmatprep.subr.mxu0 0.0
        %495 = vmatpush1.msra.mxu0 0.0
        %496 = vmatprep.subr.mxu0 0.0
        %497 = vmatpush1.msra.mxu0 0.0
        %498 = vmatprep.subr.mxu0 0.0
        %499 = vmatpush1.msra.mxu0 0.0
        %500 = vmatprep.subr.mxu0 0.0
        %501 = vmatpush1.msra.mxu0 0.0
        %502 = vmatprep.subr.mxu0 0.0
        %503 = vmatpush1.msra.mxu0 0.0
        %504 = vmatprep.mubr.f32.mxu0 0.0
        %505 = vmatmul.mubr.f32.gmra.mrb[0].mxu0 %v393
        %v506 = vpop.f32.mrb[0].mxu0
        %v507 = vadd.f32 %v314, %v506
        %v508 = vpop.f32.mrb[0].mxu0
        %509 = vmatprep.mubr.f32.mxu0 0.0
        %510 = vmatmul.mubr.f32.gmra.mrb[0].mxu0 %v396
        %v511 = vpop.f32.mrb[0].mxu0
        %v512 = vadd.f32 %v319, %v511
        %v513 = vpop.f32.mrb[0].mxu0
        %514 = vmatprep.mubr.f32.mxu0 0.0
        %515 = vmatmul.mubr.f32.gmra.mrb[0].mxu0 %v399
        %v516 = vpop.f32.mrb[0].mxu0
        %v517 = vadd.f32 %v324, %v516
        %v518 = vpop.f32.mrb[0].mxu0
        %519 = vmatprep.mubr.f32.mxu0 0.0
        %520 = vmatmul.mubr.f32.gmra.mrb[0].mxu0 %v402
        %v521 = vpop.f32.mrb[0].mxu0
        %v522 = vadd.f32 %v329, %v521
        %v523 = vpop.f32.mrb[0].mxu0
        %524 = vmatprep.mubr.f32.mxu0 0.0
        %525 = vmatmul.mubr.f32.gmra.mrb[0].mxu0 %v405
        %v526 = vpop.f32.mrb[0].mxu0
        %v527 = vadd.f32 %v334, %v526
        %v528 = vpop.f32.mrb[0].mxu0
        %529 = vmatprep.mubr.f32.mxu0 0.0
        %530 = vmatmul.mubr.f32.gmra.mrb[0].mxu0 %v408
        %v531 = vpop.f32.mrb[0].mxu0
        %v532 = vadd.f32 %v339, %v531
        %v533 = vpop.f32.mrb[0].mxu0
        %534 = vmatprep.mubr.f32.mxu0 0.0
        %535 = vmatmul.mubr.f32.gmra.mrb[0].mxu0 %v411
        %v536 = vpop.f32.mrb[0].mxu0
        %v537 = vadd.f32 %v344, %v536
        %v538 = vpop.f32.mrb[0].mxu0
        %539 = vmatprep.mubr.f32.mxu0 0.0
        %540 = vmatmul.mubr.f32.gmra.mrb[0].mxu0 %v414
        %v541 = vpop.f32.mrb[0].mxu0
        %v542 = vadd.f32 %v349, %v541
        %v543 = vpop.f32.mrb[0].mxu0
        %544 = vmatprep.mubr.f32.mxu0 0.0
        %545 = vmatmul.mubr.f32.gmra.mrb[0].mxu0 %v417
        %v546 = vpop.f32.mrb[0].mxu0
        %v547 = vadd.f32 %v354, %v546
        %v548 = vpop.f32.mrb[0].mxu0
        %549 = vmatprep.mubr.f32.mxu0 0.0
        %550 = vmatmul.mubr.f32.gmra.mrb[0].mxu0 %v420
        %v551 = vpop.f32.mrb[0].mxu0
        %v552 = vadd.f32 %v359, %v551
        %v553 = vpop.f32.mrb[0].mxu0
        %554 = vmatprep.mubr.f32.mxu0 0.0
        %555 = vmatmul.mubr.f32.gmra.mrb[0].mxu0 %v423
        %v556 = vpop.f32.mrb[0].mxu0
        %v557 = vadd.f32 %v364, %v556
        %v558 = vpop.f32.mrb[0].mxu0
        %559 = vmatprep.mubr.f32.mxu0 0.0
        %560 = vmatmul.mubr.f32.gmra.mrb[0].mxu0 %v426
        %v561 = vpop.f32.mrb[0].mxu0
        %v562 = vadd.f32 %v369, %v561
        %v563 = vpop.f32.mrb[0].mxu0
        %564 = vmatprep.mubr.f32.mxu0 0.0
        %565 = vmatmul.mubr.f32.gmra.mrb[0].mxu0 %v429
        %v566 = vpop.f32.mrb[0].mxu0
        %v567 = vadd.f32 %v374, %v566
        %v568 = vpop.f32.mrb[0].mxu0
        %569 = vmatprep.mubr.f32.mxu0 0.0
        %570 = vmatmul.mubr.f32.gmra.mrb[0].mxu0 %v432
        %v571 = vpop.f32.mrb[0].mxu0
        %v572 = vadd.f32 %v379, %v571
        %v573 = vpop.f32.mrb[0].mxu0
        %574 = vmatprep.mubr.f32.mxu0 0.0
        %575 = vmatmul.mubr.f32.gmra.mrb[0].mxu0 %v435
        %v576 = vpop.f32.mrb[0].mxu0
        %v577 = vadd.f32 %v384, %v576
        %v578 = vpop.f32.mrb[0].mxu0
        %579 = vmatprep.mubr.f32.mxu0 0.0
        %580 = vmatmul.mubr.f32.gmra.mrb[0].mxu0 %v438
        %v581 = vpop.f32.mrb[0].mxu0
        %v582 = vadd.f32 %v389, %v581
        %v583 = vpop.f32.mrb[0].mxu0
        %584 = vdwg.mxu0
        %v585 = vmax.f32 %v507, 0.0
        %v586 = vmax.f32 %v512, 0.0
        %v587 = vmax.f32 %v517, 0.0
        %v588 = vmax.f32 %v522, 0.0
        %v589 = vmax.f32 %v527, 0.0
        %v590 = vmax.f32 %v532, 0.0
        %v591 = vmax.f32 %v537, 0.0
        %v592 = vmax.f32 %v542, 0.0
        %v593 = vmax.f32 %v547, 0.0
        %v594 = vmax.f32 %v552, 0.0
        %v595 = vmax.f32 %v557, 0.0
        %v596 = vmax.f32 %v562, 0.0
        %v597 = vmax.f32 %v567, 0.0
        %v598 = vmax.f32 %v572, 0.0
        %v599 = vmax.f32 %v577, 0.0
        %v600 = vmax.f32 %v582, 0.0
        %v601 = vld [vmem:[%s3] sm:$0xff]
        %v602 = vld [vmem:[%s3 + $0x8] sm:$0xff]
        %v603 = vld [vmem:[%s3 + $0x10] sm:$0xff]
        %v604 = vld [vmem:[%s3 + $0x18] sm:$0xff]
        %v605 = vld [vmem:[%s3 + $0x20] sm:$0xff]
        %v606 = vld [vmem:[%s3 + $0x28] sm:$0xff]
        %v607 = vld [vmem:[%s3 + $0x30] sm:$0xff]
        %v608 = vld [vmem:[%s3 + $0x38] sm:$0xff]
        %v609 = vld [vmem:[%s3 + $0x40] sm:$0xff]
        %v610 = vld [vmem:[%s3 + $0x48] sm:$0xff]
        %v611 = vld [vmem:[%s3 + $0x50] sm:$0xff]
        %v612 = vld [vmem:[%s3 + $0x58] sm:$0xff]
        %v613 = vld [vmem:[%s3 + $0x60] sm:$0xff]
        %v614 = vld [vmem:[%s3 + $0x68] sm:$0xff]
        %v615 = vld [vmem:[%s3 + $0x70] sm:$0xff]
        %v616 = vld [vmem:[%s3 + $0x78] sm:$0xff]
        %v617 = vld [vmem:[%s4] sm:$0xff]
        %v618 = vld [vmem:[%s4 + $0x8] sm:$0xff]
        %v619 = vld [vmem:[%s4 + $0x10] sm:$0xff]
        %v620 = vld [vmem:[%s4 + $0x18] sm:$0xff]
        %v621 = vld [vmem:[%s4 + $0x20] sm:$0xff]
        %v622 = vld [vmem:[%s4 + $0x28] sm:$0xff]
        %v623 = vld [vmem:[%s4 + $0x30] sm:$0xff]
        %v624 = vld [vmem:[%s4 + $0x38] sm:$0xff]
        %v625 = vld [vmem:[%s4 + $0x40] sm:$0xff]
        %v626 = vld [vmem:[%s4 + $0x48] sm:$0xff]
        %v627 = vld [vmem:[%s4 + $0x50] sm:$0xff]
        %v628 = vld [vmem:[%s4 + $0x58] sm:$0xff]
        %v629 = vld [vmem:[%s4 + $0x60] sm:$0xff]
        %v630 = vld [vmem:[%s4 + $0x68] sm:$0xff]
        %v631 = vld [vmem:[%s4 + $0x70] sm:$0xff]
        %v632 = vld [vmem:[%s4 + $0x78] sm:$0xff]
        %634 = vset.pattern.permute.xlu0 0
        %635 = vperm.xlu0 %634, %v617
        %v636 = vpop.permute.xlu0 %635
        %639 = vset.pattern.permute.xlu0 0
        %640 = vperm.xlu0 %639, %v618
        %v641 = vpop.permute.xlu0 %640
        %644 = vset.pattern.permute.xlu0 0
        %645 = vperm.xlu0 %644, %v619
        %v646 = vpop.permute.xlu0 %645
        %649 = vset.pattern.permute.xlu0 0
        %650 = vperm.xlu0 %649, %v620
        %v651 = vpop.permute.xlu0 %650
        %654 = vset.pattern.permute.xlu0 0
        %655 = vperm.xlu0 %654, %v621
        %v656 = vpop.permute.xlu0 %655
        %659 = vset.pattern.permute.xlu0 0
        %660 = vperm.xlu0 %659, %v622
        %v661 = vpop.permute.xlu0 %660
        %664 = vset.pattern.permute.xlu0 0
        %665 = vperm.xlu0 %664, %v623
        %v666 = vpop.permute.xlu0 %665
        %669 = vset.pattern.permute.xlu0 0
        %670 = vperm.xlu0 %669, %v624
        %v671 = vpop.permute.xlu0 %670
        %674 = vset.pattern.permute.xlu0 0
        %675 = vperm.xlu0 %674, %v625
        %v676 = vpop.permute.xlu0 %675
        %679 = vset.pattern.permute.xlu0 0
        %680 = vperm.xlu0 %679, %v626
        %v681 = vpop.permute.xlu0 %680
        %684 = vset.pattern.permute.xlu0 0
        %685 = vperm.xlu0 %684, %v627
        %v686 = vpop.permute.xlu0 %685
        %689 = vset.pattern.permute.xlu0 0
        %690 = vperm.xlu0 %689, %v628
        %v691 = vpop.permute.xlu0 %690
        %694 = vset.pattern.permute.xlu0 0
        %695 = vperm.xlu0 %694, %v629
        %v696 = vpop.permute.xlu0 %695
        %699 = vset.pattern.permute.xlu0 0
        %700 = vperm.xlu0 %699, %v630
        %v701 = vpop.permute.xlu0 %700
        %704 = vset.pattern.permute.xlu0 0
        %705 = vperm.xlu0 %704, %v631
        %v706 = vpop.permute.xlu0 %705
        %709 = vset.pattern.permute.xlu0 0
        %710 = vperm.xlu0 %709, %v632
        %v711 = vpop.permute.xlu0 %710
        %713 = vmatprep.subr.mxu0 0.0
        %714 = vmatpush1.msra.mxu0 %v585
        %715 = vmatprep.subr.mxu0 0.0
        %716 = vmatpush1.msra.mxu0 %v586
        %717 = vmatprep.subr.mxu0 0.0
        %718 = vmatpush1.msra.mxu0 %v587
        %719 = vmatprep.subr.mxu0 0.0
        %720 = vmatpush1.msra.mxu0 %v588
        %721 = vmatprep.subr.mxu0 0.0
        %722 = vmatpush1.msra.mxu0 %v589
        %723 = vmatprep.subr.mxu0 0.0
        %724 = vmatpush1.msra.mxu0 %v590
        %725 = vmatprep.subr.mxu0 0.0
        %726 = vmatpush1.msra.mxu0 %v591
        %727 = vmatprep.subr.mxu0 0.0
        %728 = vmatpush1.msra.mxu0 %v592
        %729 = vmatprep.subr.mxu0 0.0
        %730 = vmatpush1.msra.mxu0 %v593
        %731 = vmatprep.subr.mxu0 0.0
        %732 = vmatpush1.msra.mxu0 %v594
        %733 = vmatprep.subr.mxu0 0.0
        %734 = vmatpush1.msra.mxu0 %v595
        %735 = vmatprep.subr.mxu0 0.0
        %736 = vmatpush1.msra.mxu0 %v596
        %737 = vmatprep.subr.mxu0 0.0
        %738 = vmatpush1.msra.mxu0 %v597
        %739 = vmatprep.subr.mxu0 0.0
        %740 = vmatpush1.msra.mxu0 %v598
        %741 = vmatprep.subr.mxu0 0.0
        %742 = vmatpush1.msra.mxu0 %v599
        %743 = vmatprep.subr.mxu0 0.0
        %744 = vmatpush1.msra.mxu0 %v600
        %745 = vmatprep.subr.mxu0 0.0
        %746 = vmatpush1.msra.mxu0 0.0
        %747 = vmatprep.subr.mxu0 0.0
        %748 = vmatpush1.msra.mxu0 0.0
        %749 = vmatprep.subr.mxu0 0.0
        %750 = vmatpush1.msra.mxu0 0.0
        %751 = vmatprep.subr.mxu0 0.0
        %752 = vmatpush1.msra.mxu0 0.0
        %753 = vmatprep.subr.mxu0 0.0
        %754 = vmatpush1.msra.mxu0 0.0
        %755 = vmatprep.subr.mxu0 0.0
        %756 = vmatpush1.msra.mxu0 0.0
        %757 = vmatprep.subr.mxu0 0.0
        %758 = vmatpush1.msra.mxu0 0.0
        %759 = vmatprep.subr.mxu0 0.0
        %760 = vmatpush1.msra.mxu0 0.0
        %761 = vmatprep.subr.mxu0 0.0
        %762 = vmatpush1.msra.mxu0 0.0
        %763 = vmatprep.subr.mxu0 0.0
        %764 = vmatpush1.msra.mxu0 0.0
        %765 = vmatprep.subr.mxu0 0.0
        %766 = vmatpush1.msra.mxu0 0.0
        %767 = vmatprep.subr.mxu0 0.0
        %768 = vmatpush1.msra.mxu0 0.0
        %769 = vmatprep.subr.mxu0 0.0
        %770 = vmatpush1.msra.mxu0 0.0
        %771 = vmatprep.subr.mxu0 0.0
        %772 = vmatpush1.msra.mxu0 0.0
        %773 = vmatprep.subr.mxu0 0.0
        %774 = vmatpush1.msra.mxu0 0.0
        %775 = vmatprep.subr.mxu0 0.0
        %776 = vmatpush1.msra.mxu0 0.0
        %777 = vmatprep.mubr.f32.mxu0 0.0
        %778 = vmatmul.mubr.f32.gmra.mrb[0].mxu0 %v601
        %v779 = vpop.f32.mrb[0].mxu0
        %v780 = vadd.f32 %v636, %v779
        %v781 = vpop.f32.mrb[0].mxu0
        %782 = vmatprep.mubr.f32.mxu0 0.0
        %783 = vmatmul.mubr.f32.gmra.mrb[0].mxu0 %v602
        %v784 = vpop.f32.mrb[0].mxu0
        %v785 = vadd.f32 %v641, %v784
        %v786 = vpop.f32.mrb[0].mxu0
        %787 = vmatprep.mubr.f32.mxu0 0.0
        %788 = vmatmul.mubr.f32.gmra.mrb[0].mxu0 %v603
        %v789 = vpop.f32.mrb[0].mxu0
        %v790 = vadd.f32 %v646, %v789
        %v791 = vpop.f32.mrb[0].mxu0
        %792 = vmatprep.mubr.f32.mxu0 0.0
        %793 = vmatmul.mubr.f32.gmra.mrb[0].mxu0 %v604
        %v794 = vpop.f32.mrb[0].mxu0
        %v795 = vadd.f32 %v651, %v794
        %v796 = vpop.f32.mrb[0].mxu0
        %797 = vmatprep.mubr.f32.mxu0 0.0
        %798 = vmatmul.mubr.f32.gmra.mrb[0].mxu0 %v605
        %v799 = vpop.f32.mrb[0].mxu0
        %v800 = vadd.f32 %v656, %v799
        %v801 = vpop.f32.mrb[0].mxu0
        %802 = vmatprep.mubr.f32.mxu0 0.0
        %803 = vmatmul.mubr.f32.gmra.mrb[0].mxu0 %v606
        %v804 = vpop.f32.mrb[0].mxu0
        %v805 = vadd.f32 %v661, %v804
        %v806 = vpop.f32.mrb[0].mxu0
        %807 = vmatprep.mubr.f32.mxu0 0.0
        %808 = vmatmul.mubr.f32.gmra.mrb[0].mxu0 %v607
        %v809 = vpop.f32.mrb[0].mxu0
        %v810 = vadd.f32 %v666, %v809
        %v811 = vpop.f32.mrb[0].mxu0
        %812 = vmatprep.mubr.f32.mxu0 0.0
        %813 = vmatmul.mubr.f32.gmra.mrb[0].mxu0 %v608
        %v814 = vpop.f32.mrb[0].mxu0
        %v815 = vadd.f32 %v671, %v814
        %v816 = vpop.f32.mrb[0].mxu0
        %817 = vmatprep.mubr.f32.mxu0 0.0
        %818 = vmatmul.mubr.f32.gmra.mrb[0].mxu0 %v609
        %v819 = vpop.f32.mrb[0].mxu0
        %v820 = vadd.f32 %v676, %v819
        %v821 = vpop.f32.mrb[0].mxu0
        %822 = vmatprep.mubr.f32.mxu0 0.0
        %823 = vmatmul.mubr.f32.gmra.mrb[0].mxu0 %v610
        %v824 = vpop.f32.mrb[0].mxu0
        %v825 = vadd.f32 %v681, %v824
        %v826 = vpop.f32.mrb[0].mxu0
        %827 = vmatprep.mubr.f32.mxu0 0.0
        %828 = vmatmul.mubr.f32.gmra.mrb[0].mxu0 %v611
        %v829 = vpop.f32.mrb[0].mxu0
        %v830 = vadd.f32 %v686, %v829
        %v831 = vpop.f32.mrb[0].mxu0
        %832 = vmatprep.mubr.f32.mxu0 0.0
        %833 = vmatmul.mubr.f32.gmra.mrb[0].mxu0 %v612
        %v834 = vpop.f32.mrb[0].mxu0
        %v835 = vadd.f32 %v691, %v834
        %v836 = vpop.f32.mrb[0].mxu0
        %837 = vmatprep.mubr.f32.mxu0 0.0
        %838 = vmatmul.mubr.f32.gmra.mrb[0].mxu0 %v613
        %v839 = vpop.f32.mrb[0].mxu0
        %v840 = vadd.f32 %v696, %v839
        %v841 = vpop.f32.mrb[0].mxu0
        %842 = vmatprep.mubr.f32.mxu0 0.0
        %843 = vmatmul.mubr.f32.gmra.mrb[0].mxu0 %v614
        %v844 = vpop.f32.mrb[0].mxu0
        %v845 = vadd.f32 %v701, %v844
        %v846 = vpop.f32.mrb[0].mxu0
        %847 = vmatprep.mubr.f32.mxu0 0.0
        %848 = vmatmul.mubr.f32.gmra.mrb[0].mxu0 %v615
        %v849 = vpop.f32.mrb[0].mxu0
        %v850 = vadd.f32 %v706, %v849
        %v851 = vpop.f32.mrb[0].mxu0
        %852 = vmatprep.mubr.f32.mxu0 0.0
        %853 = vmatmul.mubr.f32.gmra.mrb[0].mxu0 %v616
        %v854 = vpop.f32.mrb[0].mxu0
        %v855 = vadd.f32 %v711, %v854
        %v856 = vpop.f32.mrb[0].mxu0
        %857 = vdwg.mxu0
        %v858 = vmax.f32 %v780, 0.0
        %v859 = vmax.f32 %v785, 0.0
        %v860 = vmax.f32 %v790, 0.0
        %v861 = vmax.f32 %v795, 0.0
        %v862 = vmax.f32 %v800, 0.0
        %v863 = vmax.f32 %v805, 0.0
        %v864 = vmax.f32 %v810, 0.0
        %v865 = vmax.f32 %v815, 0.0
        %v866 = vmax.f32 %v820, 0.0
        %v867 = vmax.f32 %v825, 0.0
        %v868 = vmax.f32 %v830, 0.0
        %v869 = vmax.f32 %v835, 0.0
        %v870 = vmax.f32 %v840, 0.0
        %v871 = vmax.f32 %v845, 0.0
        %v872 = vmax.f32 %v850, 0.0
        %v873 = vmax.f32 %v855, 0.0
        %v874 = vld [vmem:[%s5] sm:$0xff]
        %v875 = vld [vmem:[%s5 + $0x8] sm:$0xff]
        %v876 = vld [vmem:[%s5 + $0x10] sm:$0xff]
        %v877 = vld [vmem:[%s5 + $0x18] sm:$0xff]
        %v878 = vld [vmem:[%s5 + $0x20] sm:$0xff]
        %v879 = vld [vmem:[%s5 + $0x28] sm:$0xff]
        %v880 = vld [vmem:[%s5 + $0x30] sm:$0xff]
        %v881 = vld [vmem:[%s5 + $0x38] sm:$0xff]
        %v882 = vld [vmem:[%s5 + $0x40] sm:$0xff]
        %v883 = vld [vmem:[%s5 + $0x48] sm:$0xff]
        %v884 = vld [vmem:[%s5 + $0x50] sm:$0xff]
        %v885 = vld [vmem:[%s5 + $0x58] sm:$0xff]
        %v886 = vld [vmem:[%s5 + $0x60] sm:$0xff]
        %v887 = vld [vmem:[%s5 + $0x68] sm:$0xff]
        %v888 = vld [vmem:[%s5 + $0x70] sm:$0xff]
        %v889 = vld [vmem:[%s5 + $0x78] sm:$0xff]
        %891 = vset.pattern.permute.xlu0 0
        %892 = vperm.xlu0 %891, %v874
        %v893 = vpop.permute.xlu0 %892
        %896 = vset.pattern.permute.xlu0 0
        %897 = vperm.xlu0 %896, %v875
        %v898 = vpop.permute.xlu0 %897
        %901 = vset.pattern.permute.xlu0 0
        %902 = vperm.xlu0 %901, %v876
        %v903 = vpop.permute.xlu0 %902
        %906 = vset.pattern.permute.xlu0 0
        %907 = vperm.xlu0 %906, %v877
        %v908 = vpop.permute.xlu0 %907
        %911 = vset.pattern.permute.xlu0 0
        %912 = vperm.xlu0 %911, %v878
        %v913 = vpop.permute.xlu0 %912
        %916 = vset.pattern.permute.xlu0 0
        %917 = vperm.xlu0 %916, %v879
        %v918 = vpop.permute.xlu0 %917
        %921 = vset.pattern.permute.xlu0 0
        %922 = vperm.xlu0 %921, %v880
        %v923 = vpop.permute.xlu0 %922
        %926 = vset.pattern.permute.xlu0 0
        %927 = vperm.xlu0 %926, %v881
        %v928 = vpop.permute.xlu0 %927
        %931 = vset.pattern.permute.xlu0 0
        %932 = vperm.xlu0 %931, %v882
        %v933 = vpop.permute.xlu0 %932
        %936 = vset.pattern.permute.xlu0 0
        %937 = vperm.xlu0 %936, %v883
        %v938 = vpop.permute.xlu0 %937
        %941 = vset.pattern.permute.xlu0 0
        %942 = vperm.xlu0 %941, %v884
        %v943 = vpop.permute.xlu0 %942
        %946 = vset.pattern.permute.xlu0 0
        %947 = vperm.xlu0 %946, %v885
        %v948 = vpop.permute.xlu0 %947
        %951 = vset.pattern.permute.xlu0 0
        %952 = vperm.xlu0 %951, %v886
        %v953 = vpop.permute.xlu0 %952
        %956 = vset.pattern.permute.xlu0 0
        %957 = vperm.xlu0 %956, %v887
        %v958 = vpop.permute.xlu0 %957
        %961 = vset.pattern.permute.xlu0 0
        %962 = vperm.xlu0 %961, %v888
        %v963 = vpop.permute.xlu0 %962
        %966 = vset.pattern.permute.xlu0 0
        %967 = vperm.xlu0 %966, %v889
        %v968 = vpop.permute.xlu0 %967
        %v970 = vmul.f32 %v858, %v893
        %v971 = vmul.f32 %v859, %v898
        %v972 = vmul.f32 %v860, %v903
        %v973 = vmul.f32 %v861, %v908
        %v974 = vmul.f32 %v862, %v913
        %v975 = vmul.f32 %v863, %v918
        %v976 = vmul.f32 %v864, %v923
        %v977 = vmul.f32 %v865, %v928
        %v978 = vmul.f32 %v866, %v933
        %v979 = vmul.f32 %v867, %v938
        %v980 = vmul.f32 %v868, %v943
        %v981 = vmul.f32 %v869, %v948
        %v982 = vmul.f32 %v870, %v953
        %v983 = vmul.f32 %v871, %v958
        %v984 = vmul.f32 %v872, %v963
        %v985 = vmul.f32 %v873, %v968
        %vm986 = vcmask 64512
        %v987 = vsel %vm986, %v970, 0.0
        %v988 = vsel %vm986, %v971, 0.0
        %v989 = vadd.f32 %v987, %v988
        %v990 = vsel %vm986, %v972, 0.0
        %v991 = vadd.f32 %v989, %v990
        %v992 = vsel %vm986, %v973, 0.0
        %v993 = vadd.f32 %v991, %v992
        %v994 = vsel %vm986, %v974, 0.0
        %v995 = vadd.f32 %v993, %v994
        %v996 = vsel %vm986, %v975, 0.0
        %v997 = vadd.f32 %v995, %v996
        %v998 = vsel %vm986, %v976, 0.0
        %v999 = vadd.f32 %v997, %v998
        %v1000 = vsel %vm986, %v977, 0.0
        %v1001 = vadd.f32 %v999, %v1000
        %v1002 = vsel %vm986, %v978, 0.0
        %v1003 = vadd.f32 %v1001, %v1002
        %v1004 = vsel %vm986, %v979, 0.0
        %v1005 = vadd.f32 %v1003, %v1004
        %v1006 = vsel %vm986, %v980, 0.0
        %v1007 = vadd.f32 %v1005, %v1006
        %v1008 = vsel %vm986, %v981, 0.0
        %v1009 = vadd.f32 %v1007, %v1008
        %v1010 = vsel %vm986, %v982, 0.0
        %v1011 = vadd.f32 %v1009, %v1010
        %v1012 = vsel %vm986, %v983, 0.0
        %v1013 = vadd.f32 %v1011, %v1012
        %v1014 = vsel %vm986, %v984, 0.0
        %v1015 = vadd.f32 %v1013, %v1014
        %v1016 = vsel %vm986, %v985, 0.0
        %v1017 = vadd.f32 %v1015, %v1016
        %v1018 = vrot.slane %v1017, 4
        %v1019 = vadd.f32 %v1017, %v1018
        %v1020 = vrot.slane %v1019, 2
        %v1021 = vadd.f32 %v1019, %v1020
        %v1022 = vrot.slane %v1021, 1
        %v1023 = vadd.f32 %v1021, %v1022
        %s1024 = sld [smem:[#allocation2]]
        %v1025 = vstv %s1024
        %v1026 = vadd.f32 %v1023, %v1025
        %v1027 = vsel %vm986, %v1026, -inf
        %1028 = vmax.xlane.f32.xlu0 %v1027
        %v1029 = vpop.xlane.xlu0 %1028
        %v1030 = vsub.f32 %v1026, %v1029
        %v1031 = vmul.f32 %v1030, 1.442695
        %v1032 = vpow.pop %v1031
        %v1033 = vsel %vm986, %v1032, 0.0
        %1034 = vadd.xlane.f32.xlu0 %v1033
        %v1035 = vpop.xlane.xlu0 %1034
        %v1036 = vrcp.pop %v1035
        %v1037 = vmul.f32 %v1032, %v1036
        %vm1038 = vcmask 57344
        %1039 = vst.msk [vmem:[%s271] sm:$0x1] %vm1038, %v1037
        %s1040 = sand.u32 %s182, 1
        %s1041 = scalar_lea.sflag [#allocation4], %s1040
        %s1042 = sand.u32 %s182, 1
        %s1043 = scalar_lea.vmem [#allocation3], %s1042
        // Predicated region
        $region49: #{tpu_custom_call.1} parent=47 // pred_check
          %p1044 = pneg %p192
        $region50: #{tpu_custom_call.1} parent=47 // pred_check_branch
          %1046 = sbr.rel (%p1044) target = $region52
        $region51: #{tpu_custom_call.1} parent=47 // pred_region
          %s1048 = ssub.s32 16, 16
          %1049 = vsyncadd %s1041, %s1048
          %s1050 = smul.addr %s22, 16
          %s1051 = scalar_lea.hbm %s7, %s1050
          %s1053 = sshll.u32 %s1043, 4
          %s1054 = int_to_ptr.vmem [resolvable:$true] %s1053
          %1056 = dma.vmem_to_hbm [thread:$0]  %s1054, 16, %s1051, %s1041
        $region52: #{tpu_custom_call.1} parent=47 // pred_fallthru
          _
      $region48: #{tpu_custom_call.1} parent=5 // pred_fallthru
        _
      %p1057 = scmp.le.s32.totalorder 2, %s17
      // Predicated region
      $region53: #{tpu_custom_call.1} parent=5 // pred_check
        %p1058 = pneg %p1057
      $region54: #{tpu_custom_call.1} parent=5 // pred_check_branch
        %1060 = sbr.rel (%p1058) target = $region56
      $region55: #{tpu_custom_call.1} parent=5 // pred_region
        %s1061 = ssub.s32 %s17, 2
        // Predicated region
        $region57: #{tpu_custom_call.1} parent=55 // pred_check
          %p1062 = pneg %p198
        $region58: #{tpu_custom_call.1} parent=55 // pred_check_branch
          %1064 = sbr.rel (%p1062) target = $region60
        $region59: #{tpu_custom_call.1} parent=55 // pred_region
          %s1065 = sand.u32 %s183, 1
          %s1066 = scalar_lea.sflag [#allocation4], %s1065
          %s1067 = sand.u32 %s183, 1
          %s1068 = scalar_lea.vmem [#allocation3], %s1067
          %1069 = dma.done %s1066, 16
        $region60: #{tpu_custom_call.1} parent=55 // pred_fallthru
          _
      $region56: #{tpu_custom_call.1} parent=5 // pred_fallthru
        _
    $region6: #{tpu_custom_call.1} parent=1 // loop_footer
      %s21 = sadd.s32 1, %s17
    $region7: #{tpu_custom_call.1} parent=1 // loop_footer_branch
      %16 = sbr.rel target = $region3
    $region8: #{tpu_custom_call.1} parent=1 // loop_exit
      _
    %1070 = vsyncpa [#allocation4], 1
    %s1071 = scalar_lea.sflag [#allocation4], 1
    %1072 = vsyncpa %s1071, 1

</llo_original>
